<compile_context>
chip_gen: v7x
topology: tpu7x:2x2x1
jax: 0.10.0
libtpu: 0.0.40
codegen_flags: <defaults>
</compile_context>

<pallas_src>
import jax
import jax.numpy as jnp
from jax.experimental import pallas as pl
from jax.experimental.pallas import tpu as pltpu


# ----------------------------------------------------------------------------
# Small helpers
# ----------------------------------------------------------------------------
def _round_up(x, m):
    return ((x + m - 1) // m) * m


def _cdiv(a, b):
    return (a + b - 1) // b


def _vmem_budget_bytes():
    """~85% of this generation's VMEM (compiler scratch headroom); 64 MiB fallback."""
    try:
        cap = int(pltpu.get_tpu_info().vmem_capacity_bytes)
    except Exception:
        cap = 64 << 20  # conservative: v7x per-TensorCore VMEM
    return int(cap * 0.85)


def _block_spec(shape, index_map, *, buffers=None):
    """BlockSpec with optional explicit buffer count (Buffered(1) = resident, no
    double buffering).  Falls back to the default spec if pipeline_mode is not
    available in this JAX version."""
    if buffers is not None:
        try:
            return pl.BlockSpec(shape, index_map, pipeline_mode=pl.Buffered(buffers))
        except (TypeError, AttributeError):
            pass
    return pl.BlockSpec(shape, index_map)


# ----------------------------------------------------------------------------
# Kernels
# ----------------------------------------------------------------------------
def _collapsed_kernel(w_ref, x_ref, o_ref):
    """Y = W @ X with W = U * diag(sig_eff) * Vt precomputed once per weight update."""
    o_ref[...] = jnp.dot(w_ref[...], x_ref[...],
                         preferred_element_type=jnp.float32).astype(o_ref.dtype)


def _factored_kernel(us_ref, vt_ref, x_ref, o_ref, t_ref):
    """t = Vt @ X (once per batch tile), then Y_tile = (U*sig_eff)_tile @ t."""
    @pl.when(pl.program_id(1) == 0)
    def _():
        t_ref[...] = jnp.dot(vt_ref[...], x_ref[...],
                             preferred_element_type=jnp.float32).astype(t_ref.dtype)

    o_ref[...] = jnp.dot(us_ref[...], t_ref[...],
                         preferred_element_type=jnp.float32).astype(o_ref.dtype)


# ----------------------------------------------------------------------------
# Weight preprocessing (hoist out of the per-forward path; cache per weight update)
# ----------------------------------------------------------------------------
def svd_linear_precompute(U, sigma, Vt, depth, *, compute_dtype=jnp.bfloat16,
                          collapse=None, mxu_granule=256):
    """Fold sigma_eff into U, optionally collapse to W = U*diag(sig_eff)*Vt, cast to
    the MXU compute dtype, and pad M for full MXU tiles.  Returns a params dict
    consumed by svd_linear_apply."""
    # TODO(synk): RotMat's internal parametrization (getU) and detach_SVD are
    # host-side weight ops outside the forward kernel; U / Vt are taken as given.
    N, M = U.shape
    assert Vt.shape == (M, N) and sigma.shape == (M, 1) and depth > 0

    sig = sigma.astype(jnp.float32)
    if depth % 2 != 0:
        sig_eff = jnp.abs(sig) ** depth
    else:
        sig_eff = jnp.abs(sig) ** (depth - 1) * sig
    u_scaled = U.astype(jnp.float32) * sig_eff.T                     # (N, M), f32 fold

    if collapse is None:
        # MXU-granularity-aware: with small M the factored matmuls use a fraction of
        # the MXU tile, so compare costs in units of MXU granules, not raw dims.
        collapse = 2 * _cdiv(M, mxu_granule) >= _cdiv(N, mxu_granule)

    cd = jnp.dtype(compute_dtype)
    if collapse:
        w = jnp.dot(u_scaled, Vt.astype(jnp.float32),
                    preferred_element_type=jnp.float32).astype(cd)   # (N, N)
        return dict(mode="collapsed", w=w, N=N, M=M, compute_dtype=cd)

    # Factored path: zero-pad M to a lane multiple so both matmuls run on full,
    # unmasked MXU tiles (exact: padded rows/cols are zero).
    M_pad = _round_up(M, 128)
    us = u_scaled.astype(cd)
    vt = Vt.astype(cd)
    if M_pad != M:
        us = jnp.pad(us, ((0, 0), (0, M_pad - M)))
        vt = jnp.pad(vt, ((0, M_pad - M), (0, 0)))
    return dict(mode="factored", us=us, vt=vt, N=N, M=M, M_pad=M_pad,
                compute_dtype=cd)


# ----------------------------------------------------------------------------
# Forward apply
# ----------------------------------------------------------------------------
def svd_linear_apply(params, X, *, batch_tile=1024, row_tile=1024):
    """Y = U @ (sig_eff * (Vt @ X)) with preprocessed weights.  X is (N, B)."""
    mode = params["mode"]
    N = params["N"]
    cd = params["compute_dtype"]
    assert X.ndim == 2 and X.shape[0] == N
    assert batch_tile % 128 == 0 and row_tile % 8 == 0
    B = X.shape[1]
    out_dtype = X.dtype
    itemsize = cd.itemsize
    out_itemsize = jnp.dtype(out_dtype).itemsize

    # Lane-dense batch tile; aim for >=2 "parallel" batch steps (v7x: 2 TensorCores).
    bt = 128 if B <= 128 else min(batch_tile, _round_up(_cdiv(B, 2), 128))
    # Row tile over N: streams the weights when they would not fit VMEM resident.
    nt = N if N <= row_tile else row_tile

    vmem_budget = _vmem_budget_bytes()

    def footprint(bt_, nt_):
        nb_, nn_ = _cdiv(B, bt_), _cdiv(N, nt_)
        xb = (1 if nb_ == 1 else 2) * N * bt_ * itemsize
        ob = 2 * nt_ * bt_ * out_itemsize
        if mode == "collapsed":
            wb = (1 if nn_ == 1 else 2) * nt_ * N * itemsize
            return wb + xb + ob + nt_ * bt_ * 4
        M_pad = params["M_pad"]
        ub = (1 if nn_ == 1 else 2) * nt_ * M_pad * itemsize
        return (ub + M_pad * N * itemsize + xb + ob
                + M_pad * bt_ * itemsize + (nt_ + M_pad) * bt_ * 4)

    # Shrink tiles until the double/single-buffered footprint fits the VMEM budget.
    while footprint(bt, nt) > vmem_budget:
        if bt > 128:
            bt = 128 * max(1, (bt // 128) // 2)
        elif nt > 256:
            nt = max(256, _round_up(nt // 2, 128))
        else:
            break  # smallest reasonable tiles; let the compiler try

    nb, nn = _cdiv(B, bt), _cdiv(N, nt)
    grid = (nb, nn)
    x = X.astype(cd)

    def build_and_run(single_buffer_weights):
        w_buf = 1 if (single_buffer_weights and nn == 1) else None
        x_buf = 1 if (single_buffer_weights and nb == 1) else None
        if mode == "collapsed":
            kernel = _collapsed_kernel
            operands = (params["w"], x)
            in_specs = [
                _block_spec((nt, N), lambda b, n: (n, 0), buffers=w_buf),   # W row tile
                _block_spec((N, bt), lambda b, n: (0, b), buffers=x_buf),   # X col tile
            ]
            scratch = []
            semantics = ("parallel", "parallel")
            flops = 2 * N * N * B
            bytes_acc = N * N * itemsize + N * B * (itemsize + out_itemsize)
        else:
            M_pad = params["M_pad"]
            kernel = _factored_kernel
            operands = (params["us"], params["vt"], x)
            in_specs = [
                _block_spec((nt, M_pad), lambda b, n: (n, 0), buffers=w_buf),  # U*S rows
                _block_spec((M_pad, N), lambda b, n: (0, 0),                   # Vt resident
                            buffers=(1 if single_buffer_weights else None)),
                _block_spec((N, bt), lambda b, n: (0, b), buffers=x_buf),      # X col tile
            ]
            scratch = [pltpu.VMEM((M_pad, bt), cd)]                            # t = Vt @ X
            semantics = ("parallel", "arbitrary")   # N axis reuses the t scratch
            flops = 4 * params["M"] * N * B
            bytes_acc = 2 * M_pad * N * itemsize + N * B * (itemsize + out_itemsize)

        out_specs = pl.BlockSpec((nt, bt), lambda b, n: (n, b))

        return pl.pallas_call(
            kernel,
            out_shape=jax.ShapeDtypeStruct((N, B), out_dtype),
            grid_spec=pltpu.PrefetchScalarGridSpec(
                num_scalar_prefetch=0,
                grid=grid,
                in_specs=in_specs,
                out_specs=out_specs,
                scratch_shapes=scratch,
            ),
            compiler_params=pltpu.CompilerParams(
                dimension_semantics=semantics,
                vmem_limit_bytes=int(vmem_budget),
            ),
            cost_estimate=pl.CostEstimate(flops=int(flops), transcendentals=0,
                                          bytes_accessed=int(bytes_acc)),
        )(*operands)

    try:
        return build_and_run(True)
    except Exception:
        # Fallback: default double buffering everywhere (e.g. if Buffered(1) is
        # unsupported in this toolchain).  Genuine errors re-raise here.
        return build_and_run(False)


def svd_linear_forward(U, sigma, Vt, X, depth, *, compute_dtype=jnp.bfloat16,
                       collapse=None, batch_tile=1024, row_tile=1024,
                       mxu_granule=256):
    """Convenience one-shot forward (precompute + apply).  For inference with
    static weights, call svd_linear_precompute once and reuse its result."""
    params = svd_linear_precompute(U, sigma, Vt, depth, compute_dtype=compute_dtype,
                                   collapse=collapse, mxu_granule=mxu_granule)
    return svd_linear_apply(params, X, batch_tile=batch_tile, row_tile=row_tile)


# ----------------------------------------------------------------------------
# Pure-JAX reference (mirrors SVDLinear.forward / get_sigma)
# ----------------------------------------------------------------------------
def svd_linear_reference(U, sigma, Vt, X, depth):
    if depth % 2 != 0:
        sig_eff = jnp.abs(sigma) ** depth
    else:
        sig_eff = jnp.abs(sigma) ** (depth - 1) * sigma
    return U @ (sig_eff * (Vt @ X))


# ----------------------------------------------------------------------------
# Demo / self-test
# ----------------------------------------------------------------------------
if __name__ == "__main__":
    key = jax.random.PRNGKey(0)

    def make_params(k, N, M, B):
        k_u, k_v, k_s, k_x = jax.random.split(k, 4)
        # RotMat(N, M) ~ orthonormal columns/rows from a QR factorization.
        Qu, _ = jnp.linalg.qr(jax.random.normal(k_u, (N, N), dtype=jnp.float32))
        Qv, _ = jnp.linalg.qr(jax.random.normal(k_v, (N, N), dtype=jnp.float32))
        U = Qu[:, :M]                                            # (N, M)
        Vt = Qv[:, :M].T                                         # (M, N)
        sigma = 0.11 * jax.random.normal(k_s, (M, 1), dtype=jnp.float32)
        X = jax.random.normal(k_x, (N, B), dtype=jnp.float32)    # (N, B)
        return U, sigma, Vt, X

    k1, k2 = jax.random.split(key)

    # Case 1: odd depth, ragged batch (cdiv grid + masked trailing block, two
    # "parallel" batch steps), collapsed path chosen by the granule heuristic,
    # bf16 MXU math (production path).
    N, M, depth, B = 64, 16, 3, 300
    U, sigma, Vt, X = make_params(k1, N, M, B)
    y_ref = svd_linear_reference(U, sigma, Vt, X, depth)

    y_bf16 = jax.block_until_ready(svd_linear_forward(U, sigma, Vt, X, depth))
    assert y_bf16.shape == (N, B)
    assert jnp.allclose(y_bf16, y_ref, atol=1e-3, rtol=5e-2), \
        "bf16 collapsed kernel mismatch vs reference"

    y_f32 = jax.block_until_ready(
        svd_linear_forward(U, sigma, Vt, X, depth, compute_dtype=jnp.float32))
    assert jnp.allclose(y_f32, y_ref, atol=1e-5, rtol=1e-5), \
        "f32 collapsed kernel mismatch vs reference"

    # Case 1b: force the factored path with a small row tile so the N-tiled
    # variant (t = Vt@X staged in VMEM scratch, reused across 2 N-steps) runs.
    y_fact = jax.block_until_ready(
        svd_linear_forward(U, sigma, Vt, X, depth, compute_dtype=jnp.float32,
                           collapse=False, row_tile=32))
    assert jnp.allclose(y_fact, y_ref, atol=1e-5, rtol=1e-5), \
        "f32 factored (N-tiled) kernel mismatch vs reference"

    # Case 2: even depth (sign-preserving sigma), tiny batch; precompute hoisted
    # out of the forward call (cached-weights usage pattern).
    N2, M2, depth2, B2 = 32, 16, 4, 8
    U2, sigma2, Vt2, X2 = make_params(k2, N2, M2, B2)
    y2_ref = svd_linear_reference(U2, sigma2, Vt2, X2, depth2)
    params2 = svd_linear_precompute(U2, sigma2, Vt2, depth2,
                                    compute_dtype=jnp.float32)
    y2 = jax.block_until_ready(svd_linear_apply(params2, X2))
    assert y2.shape == (N2, B2)
    assert jnp.allclose(y2, y2_ref, atol=1e-5, rtol=1e-5), \
        "f32 collapsed kernel (even depth) mismatch vs reference"

    print("KERNEL_OK")
</pallas_src>

<mosaic_0001>
module attributes {stable_mosaic.version = 11 : i64} {
  func.func @_collapsed_kernel(%arg0: i32, %arg1: i32, %arg2: memref<64x64xbf16, #tpu.memory_space<vmem>>, %arg3: memref<64x256xbf16, #tpu.memory_space<vmem>>, %arg4: memref<64x256xf32, #tpu.memory_space<vmem>>) attributes {dimension_semantics = [#tpu.dimension_semantics<parallel>, #tpu.dimension_semantics<parallel>], iteration_bounds = array<i64: 2, 1>, scalar_prefetch = 0 : i64, scratch_operands = 0 : i64, tpu.core_type = #tpu.core_type<tc>, window_params = [{pipeline_mode = #tpu.pipeline_mode<synchronous>, transform_indices = @transform_0, window_bounds = array<i64: 64, 64>}, {transform_indices = @transform_1, window_bounds = array<i64: 64, 256>}, {transform_indices = @transform_2, window_bounds = array<i64: 64, 256>}]} {
    %c0 = arith.constant 0 : index
    %c0_0 = arith.constant 0 : index
    %0 = vector.load %arg2[%c0, %c0_0] : memref<64x64xbf16, #tpu.memory_space<vmem>>, vector<64x64xbf16>
    %c0_1 = arith.constant 0 : index
    %c0_2 = arith.constant 0 : index
    %1 = vector.load %arg3[%c0_1, %c0_2] : memref<64x256xbf16, #tpu.memory_space<vmem>>, vector<64x256xbf16>
    %cst = arith.constant dense<0.000000e+00> : vector<64x256xf32>
    %2 = tpu.matmul %0, %1, %cst {dimension_numbers = #tpu.dot_dimension_numbers<[1], [0], [0], [1], [0, 0, 1, 1], [], []>} : vector<64x64xbf16>, vector<64x256xbf16>, vector<64x256xf32> -> vector<64x256xf32>
    %c0_3 = arith.constant 0 : index
    %c0_4 = arith.constant 0 : index
    %3 = vector.load %arg4[%c0_3, %c0_4] : memref<64x256xf32, #tpu.memory_space<vmem>>, vector<64x256xf32>
    tpu.vector_store %arg4[%c0_3, %c0_4], %2 {strides = array<i32>} : memref<64x256xf32, #tpu.memory_space<vmem>>, vector<64x256xf32>,
    return
  }
  func.func @transform_0(%arg0: i32, %arg1: i32) -> (i32, i32) {
    %c0_i32 = arith.constant 0 : i32
    %c0_i32_0 = arith.constant 0 : i32
    return %arg1, %c0_i32 : i32, i32
  }
  func.func @transform_1(%arg0: i32, %arg1: i32) -> (i32, i32) {
    %c0_i32 = arith.constant 0 : i32
    %c0_i32_0 = arith.constant 0 : i32
    return %c0_i32, %arg0 : i32, i32
  }
  func.func @transform_2(%arg0: i32, %arg1: i32) -> (i32, i32) {
    %c0_i32 = arith.constant 0 : i32
    return %arg1, %arg0 : i32, i32
  }
}

module attributes {stable_mosaic.version = 11 : i64} {
  func.func @_collapsed_kernel(%arg0: i32, %arg1: i32, %arg2: memref<64x64xbf16, #tpu.memory_space<vmem>>, %arg3: memref<64x256xbf16, #tpu.memory_space<vmem>>, %arg4: memref<64x256xf32, #tpu.memory_space<vmem>>) attributes {dimension_semantics = [#tpu.dimension_semantics<parallel>, #tpu.dimension_semantics<parallel>], iteration_bounds = array<i64: 2, 1>, scalar_prefetch = 0 : i64, scratch_operands = 0 : i64, tpu.core_type = #tpu.core_type<tc>, window_params = [{transform_indices = @transform_0, window_bounds = array<i64: 64, 64>}, {transform_indices = @transform_1, window_bounds = array<i64: 64, 256>}, {transform_indices = @transform_2, window_bounds = array<i64: 64, 256>}]} {
    %c0 = arith.constant 0 : index
    %c0_0 = arith.constant 0 : index
    %0 = vector.load %arg2[%c0, %c0_0] : memref<64x64xbf16, #tpu.memory_space<vmem>>, vector<64x64xbf16>
    %c0_1 = arith.constant 0 : index
    %c0_2 = arith.constant 0 : index
    %1 = vector.load %arg3[%c0_1, %c0_2] : memref<64x256xbf16, #tpu.memory_space<vmem>>, vector<64x256xbf16>
    %cst = arith.constant dense<0.000000e+00> : vector<64x256xf32>
    %2 = tpu.matmul %0, %1, %cst {dimension_numbers = #tpu.dot_dimension_numbers<[1], [0], [0], [1], [0, 0, 1, 1], [], []>} : vector<64x64xbf16>, vector<64x256xbf16>, vector<64x256xf32> -> vector<64x256xf32>
    %c0_3 = arith.constant 0 : index
    %c0_4 = arith.constant 0 : index
    %3 = vector.load %arg4[%c0_3, %c0_4] : memref<64x256xf32, #tpu.memory_space<vmem>>, vector<64x256xf32>
    tpu.vector_store %arg4[%c0_3, %c0_4], %2 {strides = array<i32>} : memref<64x256xf32, #tpu.memory_space<vmem>>, vector<64x256xf32>,
    return
  }
  func.func @transform_0(%arg0: i32, %arg1: i32) -> (i32, i32) {
    %c0_i32 = arith.constant 0 : i32
    %c0_i32_0 = arith.constant 0 : i32
    return %arg1, %c0_i32 : i32, i32
  }
  func.func @transform_1(%arg0: i32, %arg1: i32) -> (i32, i32) {
    %c0_i32 = arith.constant 0 : i32
    %c0_i32_0 = arith.constant 0 : i32
    return %c0_i32, %arg0 : i32, i32
  }
  func.func @transform_2(%arg0: i32, %arg1: i32) -> (i32, i32) {
    %c0_i32 = arith.constant 0 : i32
    return %arg1, %arg0 : i32, i32
  }
}

</mosaic_0001>

<llo_original>
// kernel: tpu_custom_call.1
$region0: #{tpu_custom_call.1}
  #allocation0 [shape = 'u32[]', space=smem, size = 0x4, offset = 0x4, fixed_abs, tag = 'smem constant byte address 0x4 - core index']
  #allocation1 [shape = 'u32[144,128]{1,0:T(1,128)}', space=vmem, size = 0x12000, scoped, tag = 'internal scratch']
  %s0 = inlined_call_operand.hbm [shape: bf16[64,64], index: 0, kind: input, shape index: {}]
  %s1 = inlined_call_operand.hbm [shape: bf16[64,300], index: 1, kind: input, shape index: {}]
  %s2 = inlined_call_operand.hbm [shape: f32[64,300], index: 2, kind: output, shape index: {}]
  %s3 = sld [smem:[#allocation0]]
  $region49: #{tpu_custom_call.1} parent=0
    _
  %s5 = ssub.s32 1, %s3
  %s6 = scalar_select 0, %s5, %s3
  $region1: #{tpu_custom_call.1} parent=0
    #allocation2 [shape = 'u8[16384]{0}', space=vmem, size = 0x4000, scoped, tag = 'input window, operand 0, single buffered']
    #allocation3 [shape = 's32[2]{0}', space=sflag, size = 0x8, scoped, tag = 'scoped memory for tpu_custom_call.1']
    #allocation4 [shape = 's32[2]{0}', space=sflag, size = 0x8, scoped, tag = 'scoped memory for tpu_custom_call.1']
    #allocation5 [shape = 'u8[65536]{0}', space=vmem, size = 0x10000, scoped, tag = 'input window, operand 1']
    #allocation6 [shape = 's32[2]{0}', space=sflag, size = 0x8, scoped, tag = 'scoped memory for tpu_custom_call.1']
    #allocation7 [shape = 'u8[131072]{0}', space=vmem, size = 0x20000, scoped, tag = 'output window, operand 0']
    %7 = vsyncpa [#allocation3], 0
    %8 = vsyncpa [#allocation6], 0
    %s9 = scalar_lea.sflag [#allocation6], 1
    %10 = vsyncpa %s9, 0
    %11 = vsyncpa [#allocation4], 0
    %s12 = scalar_lea.sflag [#allocation4], 1
    %13 = vsyncpa %s12, 0
    loop: start=0, step=1, limit=4
    $region2: #{tpu_custom_call.1} parent=1 // loop_pre_header
      _
    $region3: #{tpu_custom_call.1} parent=1 // loop_header
      %s15 = sphi 0, %s19
      %p16 = scmp.ge.s32.totalorder %s15, 4
      %s22 = sphi 0, %s34
      %s23 = sphi 0, %s30
      %s24 = sphi 0, %s22
      %s25 = sphi 0, %s23
      %s26 = sphi 0, %s24
      %s27 = sphi 0, %s25
      %s37 = sphi 0, %s39
      %s40 = sphi 0, %s37
      %s41 = sphi 0, %s40
      %s57 = sphi 0, %s41
      %s63 = sphi 0, %s65
      %s66 = sphi 0, %s63
      %s67 = sphi 0, %s66
      %s83 = sphi 0, %s67
      %s91 = sphi 0, %s93
      %s94 = sphi 0, %s91
      %s95 = sphi 0, %s94
      %s111 = sphi 0, %s95
    $region4: #{tpu_custom_call.1} parent=1 // loop_header_branch
      %18 = sbr.rel (%p16) target = $region8
    $region5: #{tpu_custom_call.1} parent=1 // loop_body
      %s20 = ssub.s32 %s15, 1
      %s21 = ssub.s32 %s15, 2
      %s28 = sadd.s32 1, %s23
      %p29 = scmp.ge.s32.totalorder %s28, 1
      %s30 = scalar_select %p29, 0, %s28
      %s31 = sadd.s32 1, %s22
      %s32 = scalar_select %p29, %s31, %s22
      %p33 = scmp.ge.s32.totalorder %s32, 2
      %s34 = scalar_select %p33, 0, %s32
      %s35 = ssub.s32 %s23, %s30
      %p36 = scmp.eq.s32.totalorder %s35, 0
      %s38 = sadd.s32 %s37, 1
      %s39 = scalar_select %p36, %s37, %s38
      %p42 = pneg %p36
      %p43 = scmp.eq.s32.totalorder %s15, 1
      %p44 = por %p42, %p43
      %p45 = scmp.ne.s32.totalorder %s37, %s40
      %p46 = scmp.eq.s32.totalorder %s15, 0
      %p47 = por %p45, %p46
      %p48 = scmp.ne.s32.totalorder %s37, %s40
      %p49 = scmp.eq.s32.totalorder %s20, 1
      %p50 = por %p48, %p49
      %p51 = scmp.ne.s32.totalorder %s40, %s41
      %p52 = scmp.eq.s32.totalorder %s20, 0
      %p53 = por %p51, %p52
      %p54 = scmp.ne.s32.totalorder %s40, %s41
      %p55 = scmp.eq.s32.totalorder %s21, 1
      %p56 = por %p54, %p55
      %p58 = scmp.ne.s32.totalorder %s41, %s57
      %p59 = scmp.eq.s32.totalorder %s21, 0
      %p60 = por %p58, %p59
      %s61 = ssub.s32 %s22, %s34
      %p62 = scmp.eq.s32.totalorder %s61, 0
      %s64 = sadd.s32 %s63, 1
      %s65 = scalar_select %p62, %s63, %s64
      %p68 = pneg %p62
      %p69 = scmp.eq.s32.totalorder %s15, 1
      %p70 = por %p68, %p69
      %p71 = scmp.ne.s32.totalorder %s63, %s66
      %p72 = scmp.eq.s32.totalorder %s15, 0
      %p73 = por %p71, %p72
      %p74 = scmp.ne.s32.totalorder %s63, %s66
      %p75 = scmp.eq.s32.totalorder %s20, 1
      %p76 = por %p74, %p75
      %p77 = scmp.ne.s32.totalorder %s66, %s67
      %p78 = scmp.eq.s32.totalorder %s20, 0
      %p79 = por %p77, %p78
      %p80 = scmp.ne.s32.totalorder %s66, %s67
      %p81 = scmp.eq.s32.totalorder %s21, 1
      %p82 = por %p80, %p81
      %p84 = scmp.ne.s32.totalorder %s67, %s83
      %p85 = scmp.eq.s32.totalorder %s21, 0
      %p86 = por %p84, %p85
      %s87 = ssub.s32 %s23, %s30
      %s88 = ssub.s32 %s22, %s34
      %s89 = sor.u32 %s87, %s88
      %p90 = scmp.eq.s32.totalorder %s89, 0
      %s92 = sadd.s32 %s91, 1
      %s93 = scalar_select %p90, %s91, %s92
      %p96 = pneg %p90
      %p97 = scmp.eq.s32.totalorder %s15, 1
      %p98 = por %p96, %p97
      %p99 = scmp.ne.s32.totalorder %s91, %s94
      %p100 = scmp.eq.s32.totalorder %s15, 0
      %p101 = por %p99, %p100
      %p102 = scmp.ne.s32.totalorder %s91, %s94
      %p103 = scmp.eq.s32.totalorder %s20, 1
      %p104 = por %p102, %p103
      %p105 = scmp.ne.s32.totalorder %s94, %s95
      %p106 = scmp.eq.s32.totalorder %s20, 0
      %p107 = por %p105, %p106
      %p108 = scmp.ne.s32.totalorder %s94, %s95
      %p109 = scmp.eq.s32.totalorder %s21, 1
      %p110 = por %p108, %p109
      %p112 = scmp.ne.s32.totalorder %s95, %s111
      %p113 = scmp.eq.s32.totalorder %s21, 0
      %p114 = por %p112, %p113
      %p115 = scmp.le.s32.totalorder 1, %s15
      %p116 = scmp.lt.s32.totalorder %s15, 3
      %p117 = pnand %p115, %p116
      %p118 = pneg %p117
      // Predicated region
      $region9: #{tpu_custom_call.1} parent=5 // pred_check
        _
      $region10: #{tpu_custom_call.1} parent=5 // pred_check_branch
        %120 = sbr.rel (%p117) target = $region12
      $region11: #{tpu_custom_call.1} parent=5 // pred_region
        %s121 = ssub.s32 %s15, 1
        // Predicated region
        $region13: #{tpu_custom_call.1} parent=11 // pred_check
          %p122 = pneg %p53
        $region14: #{tpu_custom_call.1} parent=11 // pred_check_branch
          %124 = sbr.rel (%p122) target = $region16
        $region15: #{tpu_custom_call.1} parent=11 // pred_region
          %s125 = smul.u32 8, %s25
          %s127 = ssub.s32 512, 512
          %128 = vsyncadd [#allocation3], %s127
          %s129 = smul.addr %s125, 64
          %s130 = scalar_lea.hbm %s0, %s129
          %s131 = sshll.u32 [#allocation2], 4
          %s132 = int_to_ptr.vmem [resolvable:$true] %s131
          %137 = dma.hbm_to_vmem [thread:$0]  %s130, 512, %s132, [#allocation3], 64, 64, 4
        $region16: #{tpu_custom_call.1} parent=11 // pred_fallthru
          _
      $region12: #{tpu_custom_call.1} parent=5 // pred_fallthru
        _
      %p138 = scmp.lt.s32.totalorder %s15, 2
      // Predicated region
      $region17: #{tpu_custom_call.1} parent=5 // pred_check
        %p139 = pneg %p138
      $region18: #{tpu_custom_call.1} parent=5 // pred_check_branch
        %141 = sbr.rel (%p139) target = $region20
      $region19: #{tpu_custom_call.1} parent=5 // pred_region
        // Predicated region
        $region21: #{tpu_custom_call.1} parent=19 // pred_check
          %p142 = pneg %p73
        $region22: #{tpu_custom_call.1} parent=19 // pred_check_branch
          %144 = sbr.rel (%p142) target = $region24
        $region23: #{tpu_custom_call.1} parent=19 // pred_region
          %s145 = sand.u32 %s63, 1
          %s146 = scalar_lea.sflag [#allocation6], %s145
          %s147 = sand.u32 %s63, 1
          %s148 = smul.addr %s147, 64
          %s149 = scalar_lea.vmem [#allocation5], %s148
          %s150 = smul.u32 2, %s22
          %s151 = ssub.s32 3, %s150
          %p152 = scmp.lt.s32.totalorder %s151, 2
          %s153 = scalar_select %p152, %s151, 2
          %s154 = smul.u32 512, %s153
          %s156 = ssub.s32 1024, %s154
          %157 = vsyncadd %s146, %s156
          %p158 = scmp.ne.s32.totalorder 0, %s154
          %s159 = smul.addr %s150, 64
          %s160 = scalar_lea.hbm %s1, %s159
          %s161 = smul.u32 %s153, 4
          %s162 = smul.u32 %s161, 8
          %s163 = sshll.u32 %s149, 4
          %s164 = int_to_ptr.vmem [resolvable:$true] %s163
          %s165 = sshll.u32 %s162, 4
          %169 = dma.hbm_to_vmem [thread:$0]  (%p158), %s160, %s165, %s164, %s146, 192, 128, %s161
        $region24: #{tpu_custom_call.1} parent=19 // pred_fallthru
          _
      $region20: #{tpu_custom_call.1} parent=5 // pred_fallthru
        _
      %p170 = scmp.le.s32.totalorder 1, %s15
      %p171 = scmp.lt.s32.totalorder %s15, 3
      %p172 = pnand %p170, %p171
      %p173 = pneg %p172
      // Predicated region
      $region25: #{tpu_custom_call.1} parent=5 // pred_check
        _
      $region26: #{tpu_custom_call.1} parent=5 // pred_check_branch
        %175 = sbr.rel (%p172) target = $region28
      $region27: #{tpu_custom_call.1} parent=5 // pred_region
        %s176 = ssub.s32 %s15, 1
        // Predicated region
        $region29: #{tpu_custom_call.1} parent=27 // pred_check
          %p177 = pneg %p53
        $region30: #{tpu_custom_call.1} parent=27 // pred_check_branch
          %179 = sbr.rel (%p177) target = $region32
        $region31: #{tpu_custom_call.1} parent=27 // pred_region
          %180 = dma.done [#allocation3], 512
        $region32: #{tpu_custom_call.1} parent=27 // pred_fallthru
          _
        %s181 = sand.u32 %s66, 1
        %s182 = scalar_lea.sflag [#allocation6], %s181
        %s183 = sand.u32 %s66, 1
        %s184 = smul.addr %s183, 64
        %s185 = scalar_lea.vmem [#allocation5], %s184
        // Predicated region
        $region33: #{tpu_custom_call.1} parent=27 // pred_check
          %p186 = pneg %p79
        $region34: #{tpu_custom_call.1} parent=27 // pred_check_branch
          %188 = sbr.rel (%p186) target = $region36
        $region35: #{tpu_custom_call.1} parent=27 // pred_region
          %189 = dma.done %s182, 1024
        $region36: #{tpu_custom_call.1} parent=27 // pred_fallthru
          _
        %p190 = pneg %p53
        %p191 = pneg %p50
        %s192 = sand.u32 %s66, 1
        %s193 = scalar_lea.sflag [#allocation6], %s192
        %s194 = sand.u32 %s66, 1
        %s195 = smul.addr %s194, 64
        %s196 = scalar_lea.vmem [#allocation5], %s195
        %p197 = pneg %p79
        %p198 = pneg %p76
        %p199 = pneg %p107
        %p200 = pneg %p104
        %s201 = sand.u32 %s94, 1
        %s202 = scalar_lea.sflag [#allocation4], %s201
        %s203 = sand.u32 %s94, 1
        %s204 = smul.addr %s203, 128
        %s205 = scalar_lea.vmem [#allocation7], %s204
        %s206 = smul.u32 8, %s25
        %s207 = smul.u32 2, %s24
        %s208 = ssub.s32 3, %s207
        %p209 = scmp.lt.s32.totalorder %s208, 2
        %s210 = scalar_select %p209, %s208, 2
        %s211 = smul.u32 512, %s210
        %s212 = smul.u32 8, %s25
        %s213 = smul.u32 2, %s24
        %s214 = ssub.s32 3, %s213
        %p215 = scmp.lt.s32.totalorder %s214, 2
        %s216 = scalar_select %p215, %s214, 2
        %s217 = smul.u32 1024, %s216
        %v219 = vld [vmem:[#allocation2] sm:$0xf]
        %v220 = vld [vmem:[#allocation2 + $0x4] sm:$0xf]
        %v221 = vld [vmem:[#allocation2 + $0x8] sm:$0xf]
        %v222 = vld [vmem:[#allocation2 + $0xc] sm:$0xf]
        %v223 = vld [vmem:[#allocation2 + $0x10] sm:$0xf]
        %v224 = vld [vmem:[#allocation2 + $0x14] sm:$0xf]
        %v225 = vld [vmem:[#allocation2 + $0x18] sm:$0xf]
        %v226 = vld [vmem:[#allocation2 + $0x1c] sm:$0xf]
        %v227 = vld [vmem:[%s185] sm:$0xff]
        %v228 = vld [vmem:[%s185 + $0x8] sm:$0xff]
        %v229 = vld [vmem:[%s185 + $0x10] sm:$0xff]
        %v230 = vld [vmem:[%s185 + $0x18] sm:$0xff]
        %v231 = vld [vmem:[%s185 + $0x20] sm:$0xff]
        %v232 = vld [vmem:[%s185 + $0x28] sm:$0xff]
        %v233 = vld [vmem:[%s185 + $0x30] sm:$0xff]
        %v234 = vld [vmem:[%s185 + $0x38] sm:$0xff]
        %v243 = vunpack.c.l.b16 %v219
        %v244 = vunpack.c.l.b16 %v220
        %v245 = vunpack.c.l.b16 %v221
        %v246 = vunpack.c.l.b16 %v222
        %v247 = vunpack.c.l.b16 %v223
        %v248 = vunpack.c.l.b16 %v224
        %v249 = vunpack.c.l.b16 %v225
        %v250 = vunpack.c.l.b16 %v226
        %v251 = vpack.c.b16 %v244, %v243
        %v252 = vpack.c.b16 %v246, %v245
        %v253 = vpack.c.b16 %v248, %v247
        %v254 = vpack.c.b16 %v250, %v249
        %v263 = vunpack.c.l.b16 %v227
        %v264 = vunpack.c.h.b16 %v227
        %v265 = vunpack.c.l.b16 %v228
        %v266 = vunpack.c.h.b16 %v228
        %v267 = vunpack.c.l.b16 %v229
        %v268 = vunpack.c.h.b16 %v229
        %v269 = vunpack.c.l.b16 %v230
        %v270 = vunpack.c.h.b16 %v230
        %v271 = vunpack.c.l.b16 %v231
        %v272 = vunpack.c.h.b16 %v231
        %v273 = vunpack.c.l.b16 %v232
        %v274 = vunpack.c.h.b16 %v232
        %v275 = vunpack.c.l.b16 %v233
        %v276 = vunpack.c.h.b16 %v233
        %v277 = vunpack.c.l.b16 %v234
        %v278 = vunpack.c.h.b16 %v234
        %v279 = vpack.c.b16 %v265, %v263
        %v280 = vpack.c.b16 %v266, %v264
        %v281 = vpack.c.b16 %v269, %v267
        %v282 = vpack.c.b16 %v270, %v268
        %v283 = vpack.c.b16 %v273, %v271
        %v284 = vpack.c.b16 %v274, %v272
        %v285 = vpack.c.b16 %v277, %v275
        %v286 = vpack.c.b16 %v278, %v276
        %vm295 = vcmask 523264
        %v297 = vsel %vm295, %v251, 0
        %v300 = vsel %vm295, %v252, 0
        %v303 = vsel %vm295, %v253, 0
        %v306 = vsel %vm295, %v254, 0
        %308 = vmatprep.subr.bf16.mxu0 %v280
        %309 = vmatpush1.bf16.msra.mxu0 %v279
        %310 = vmatprep.subr.bf16.mxu0 %v282
        %311 = vmatpush1.bf16.msra.mxu0 %v281
        %312 = vmatprep.subr.bf16.mxu0 %v284
        %313 = vmatpush1.bf16.msra.mxu0 %v283
        %314 = vmatprep.subr.bf16.mxu0 %v286
        %315 = vmatpush1.bf16.msra.mxu0 %v285
        %316 = vmatprep.subr.bf16.mxu0 0
        %317 = vmatpush1.bf16.msra.mxu0 0
        %318 = vmatprep.subr.bf16.mxu0 0
        %319 = vmatpush1.bf16.msra.mxu0 0
        %320 = vmatprep.subr.bf16.mxu0 0
        %321 = vmatpush1.bf16.msra.mxu0 0
        %322 = vmatprep.subr.bf16.mxu0 0
        %323 = vmatpush1.bf16.msra.mxu0 0
        %324 = vmatprep.subr.bf16.mxu0 0
        %325 = vmatpush1.bf16.msra.mxu0 0
        %326 = vmatprep.subr.bf16.mxu0 0
        %327 = vmatpush1.bf16.msra.mxu0 0
        %328 = vmatprep.subr.bf16.mxu0 0
        %329 = vmatpush1.bf16.msra.mxu0 0
        %330 = vmatprep.subr.bf16.mxu0 0
        %331 = vmatpush1.bf16.msra.mxu0 0
        %332 = vmatprep.subr.bf16.mxu0 0
        %333 = vmatpush1.bf16.msra.mxu0 0
        %334 = vmatprep.subr.bf16.mxu0 0
        %335 = vmatpush1.bf16.msra.mxu0 0
        %336 = vmatprep.subr.bf16.mxu0 0
        %337 = vmatpush1.bf16.msra.mxu0 0
        %338 = vmatprep.subr.bf16.mxu0 0
        %339 = vmatpush1.bf16.msra.mxu0 0
        %340 = vmatprep.mubr.bf16.mxu0 0
        %341 = vmatmul.mubr.bf16.gmra.mrb[0].mxu0 %v297
        %v342 = vpop.f32.mrb[0].mxu0
        %v343 = vadd.f32 0.0, %v342
        %v344 = vpop.f32.mrb[0].mxu0
        %v345 = vadd.f32 0.0, %v344
        %v346 = vpop.f32.mrb[0].mxu0
        %v347 = vadd.f32 0.0, %v346
        %v348 = vpop.f32.mrb[0].mxu0
        %v349 = vadd.f32 0.0, %v348
        %350 = vmatprep.mubr.bf16.mxu0 0
        %351 = vmatmul.mubr.bf16.gmra.mrb[0].mxu0 %v300
        %v352 = vpop.f32.mrb[0].mxu0
        %v353 = vadd.f32 0.0, %v352
        %v354 = vpop.f32.mrb[0].mxu0
        %v355 = vadd.f32 0.0, %v354
        %v356 = vpop.f32.mrb[0].mxu0
        %v357 = vadd.f32 0.0, %v356
        %v358 = vpop.f32.mrb[0].mxu0
        %v359 = vadd.f32 0.0, %v358
        %360 = vmatprep.mubr.bf16.mxu0 0
        %361 = vmatmul.mubr.bf16.gmra.mrb[0].mxu0 %v303
        %v362 = vpop.f32.mrb[0].mxu0
        %v363 = vadd.f32 0.0, %v362
        %v364 = vpop.f32.mrb[0].mxu0
        %v365 = vadd.f32 0.0, %v364
        %v366 = vpop.f32.mrb[0].mxu0
        %v367 = vadd.f32 0.0, %v366
        %v368 = vpop.f32.mrb[0].mxu0
        %v369 = vadd.f32 0.0, %v368
        %370 = vmatprep.mubr.bf16.mxu0 0
        %371 = vmatmul.mubr.bf16.gmra.mrb[0].mxu0 %v306
        %v372 = vpop.f32.mrb[0].mxu0
        %v373 = vadd.f32 0.0, %v372
        %v374 = vpop.f32.mrb[0].mxu0
        %v375 = vadd.f32 0.0, %v374
        %v376 = vpop.f32.mrb[0].mxu0
        %v377 = vadd.f32 0.0, %v376
        %v378 = vpop.f32.mrb[0].mxu0
        %v379 = vadd.f32 0.0, %v378
        %380 = vdwg.mxu0
        %381 = vst [vmem:[%s205] sm:$0xff] %v343
        %382 = vst [vmem:[%s205 + $0x8] sm:$0xff] %v345
        %383 = vst [vmem:[%s205 + $0x10] sm:$0xff] %v347
        %384 = vst [vmem:[%s205 + $0x18] sm:$0xff] %v349
        %385 = vst [vmem:[%s205 + $0x20] sm:$0xff] %v353
        %386 = vst [vmem:[%s205 + $0x28] sm:$0xff] %v355
        %387 = vst [vmem:[%s205 + $0x30] sm:$0xff] %v357
        %388 = vst [vmem:[%s205 + $0x38] sm:$0xff] %v359
        %389 = vst [vmem:[%s205 + $0x40] sm:$0xff] %v363
        %390 = vst [vmem:[%s205 + $0x48] sm:$0xff] %v365
        %391 = vst [vmem:[%s205 + $0x50] sm:$0xff] %v367
        %392 = vst [vmem:[%s205 + $0x58] sm:$0xff] %v369
        %393 = vst [vmem:[%s205 + $0x60] sm:$0xff] %v373
        %394 = vst [vmem:[%s205 + $0x68] sm:$0xff] %v375
        %395 = vst [vmem:[%s205 + $0x70] sm:$0xff] %v377
        %396 = vst [vmem:[%s205 + $0x78] sm:$0xff] %v379
        %s397 = sand.u32 %s94, 1
        %s398 = scalar_lea.sflag [#allocation4], %s397
        %s399 = sand.u32 %s94, 1
        %s400 = smul.addr %s399, 128
        %s401 = scalar_lea.vmem [#allocation7], %s400
        // Predicated region
        $region37: #{tpu_custom_call.1} parent=27 // pred_check
          %p402 = pneg %p104
        $region38: #{tpu_custom_call.1} parent=27 // pred_check_branch
          %404 = sbr.rel (%p402) target = $region40
        $region39: #{tpu_custom_call.1} parent=27 // pred_region
          %s405 = smul.u32 8, %s25
          %s406 = smul.u32 2, %s24
          %s407 = ssub.s32 3, %s406
          %p408 = scmp.lt.s32.totalorder %s407, 2
          %s409 = scalar_select %p408, %s407, 2
          %s410 = smul.u32 1024, %s409
          %s412 = ssub.s32 2048, %s410
          %413 = vsyncadd %s398, %s412
          %p414 = scmp.ne.s32.totalorder 0, %s410
          %s415 = smul.addr %s405, 3
          %s416 = sadd.s32 %s406, %s415
          %s417 = smul.addr %s416, 128
          %s418 = scalar_lea.hbm %s2, %s417
          %s419 = smul.u32 %s409, 8
          %s420 = smul.u32 %s419, 8
          %s421 = sshll.u32 %s401, 4
          %s422 = int_to_ptr.vmem [resolvable:$true] %s421
          %s423 = sshll.u32 %s420, 4
          %427 = dma.vmem_to_hbm [thread:$0]  (%p414), %s422, %s423, %s418, %s398, 256, 384, %s419
        $region40: #{tpu_custom_call.1} parent=27 // pred_fallthru
          _
      $region28: #{tpu_custom_call.1} parent=5 // pred_fallthru
        _
      %p428 = scmp.le.s32.totalorder 2, %s15
      // Predicated region
      $region41: #{tpu_custom_call.1} parent=5 // pred_check
        %p429 = pneg %p428
      $region42: #{tpu_custom_call.1} parent=5 // pred_check_branch
        %431 = sbr.rel (%p429) target = $region44
      $region43: #{tpu_custom_call.1} parent=5 // pred_region
        %s432 = ssub.s32 %s15, 2
        // Predicated region
        $region45: #{tpu_custom_call.1} parent=43 // pred_check
          %p433 = pneg %p110
        $region46: #{tpu_custom_call.1} parent=43 // pred_check_branch
          %435 = sbr.rel (%p433) target = $region48
        $region47: #{tpu_custom_call.1} parent=43 // pred_region
          %s436 = sand.u32 %s95, 1
          %s437 = scalar_lea.sflag [#allocation4], %s436
          %s438 = sand.u32 %s95, 1
          %s439 = smul.addr %s438, 128
          %s440 = scalar_lea.vmem [#allocation7], %s439
          %441 = dma.done %s437, 2048
        $region48: #{tpu_custom_call.1} parent=43 // pred_fallthru
          _
      $region44: #{tpu_custom_call.1} parent=5 // pred_fallthru
        _
    $region6: #{tpu_custom_call.1} parent=1 // loop_footer
      %s19 = sadd.s32 1, %s15
    $region7: #{tpu_custom_call.1} parent=1 // loop_footer_branch
      %14 = sbr.rel target = $region3
    $region8: #{tpu_custom_call.1} parent=1 // loop_exit
      _
    %442 = vsyncpa [#allocation3], 1
    %s443 = scalar_lea.sflag [#allocation3], 1
    %444 = vsyncpa %s443, 1
    %445 = vsyncpa [#allocation6], 1
    %s446 = scalar_lea.sflag [#allocation6], 1
    %447 = vsyncpa %s446, 1
    %448 = vsyncpa [#allocation4], 1
    %s449 = scalar_lea.sflag [#allocation4], 1
    %450 = vsyncpa %s449, 1

// kernel: tpu_custom_call.1
$region0: #{tpu_custom_call.1}
  #allocation0 [shape = 'u32[]', space=smem, size = 0x4, offset = 0x4, fixed_abs, tag = 'smem constant byte address 0x4 - core index']
  #allocation1 [shape = 'u32[144,128]{1,0:T(1,128)}', space=vmem, size = 0x12000, scoped, tag = 'internal scratch']
  %s0 = inlined_call_operand.hbm [shape: bf16[64,64], index: 0, kind: input, shape index: {}]
  %s1 = inlined_call_operand.hbm [shape: bf16[64,300], index: 1, kind: input, shape index: {}]
  %s2 = inlined_call_operand.hbm [shape: f32[64,300], index: 2, kind: output, shape index: {}]
  %s3 = sld [smem:[#allocation0]]
  $region49: #{tpu_custom_call.1} parent=0
    _
  %s5 = ssub.s32 1, %s3
  %s6 = scalar_select 0, %s5, %s3
  $region1: #{tpu_custom_call.1} parent=0
    #allocation2 [shape = 'u8[16384]{0}', space=vmem, size = 0x4000, scoped, tag = 'input window, operand 0, single buffered']
    #allocation3 [shape = 's32[2]{0}', space=sflag, size = 0x8, scoped, tag = 'scoped memory for tpu_custom_call.1']
    #allocation4 [shape = 's32[2]{0}', space=sflag, size = 0x8, scoped, tag = 'scoped memory for tpu_custom_call.1']
    #allocation5 [shape = 'u8[65536]{0}', space=vmem, size = 0x10000, scoped, tag = 'input window, operand 1']
    #allocation6 [shape = 's32[2]{0}', space=sflag, size = 0x8, scoped, tag = 'scoped memory for tpu_custom_call.1']
    #allocation7 [shape = 'u8[131072]{0}', space=vmem, size = 0x20000, scoped, tag = 'output window, operand 0']
    %7 = vsyncpa [#allocation3], 0
    %8 = vsyncpa [#allocation6], 0
    %s9 = scalar_lea.sflag [#allocation6], 1
    %10 = vsyncpa %s9, 0
    %11 = vsyncpa [#allocation4], 0
    %s12 = scalar_lea.sflag [#allocation4], 1
    %13 = vsyncpa %s12, 0
    loop: start=0, step=1, limit=4
    $region2: #{tpu_custom_call.1} parent=1 // loop_pre_header
      _
    $region3: #{tpu_custom_call.1} parent=1 // loop_header
      %s15 = sphi 0, %s19
      %p16 = scmp.ge.s32.totalorder %s15, 4
      %s22 = sphi 0, %s34
      %s23 = sphi 0, %s30
      %s24 = sphi 0, %s22
      %s25 = sphi 0, %s23
      %s26 = sphi 0, %s24
      %s27 = sphi 0, %s25
      %s37 = sphi 0, %s39
      %s40 = sphi 0, %s37
      %s41 = sphi 0, %s40
      %s57 = sphi 0, %s41
      %s63 = sphi 0, %s65
      %s66 = sphi 0, %s63
      %s67 = sphi 0, %s66
      %s83 = sphi 0, %s67
      %s91 = sphi 0, %s93
      %s94 = sphi 0, %s91
      %s95 = sphi 0, %s94
      %s111 = sphi 0, %s95
    $region4: #{tpu_custom_call.1} parent=1 // loop_header_branch
      %18 = sbr.rel (%p16) target = $region8
    $region5: #{tpu_custom_call.1} parent=1 // loop_body
      %s20 = ssub.s32 %s15, 1
      %s21 = ssub.s32 %s15, 2
      %s28 = sadd.s32 1, %s23
      %p29 = scmp.ge.s32.totalorder %s28, 1
      %s30 = scalar_select %p29, 0, %s28
      %s31 = sadd.s32 1, %s22
      %s32 = scalar_select %p29, %s31, %s22
      %p33 = scmp.ge.s32.totalorder %s32, 2
      %s34 = scalar_select %p33, 0, %s32
      %s35 = ssub.s32 %s23, %s30
      %p36 = scmp.eq.s32.totalorder %s35, 0
      %s38 = sadd.s32 %s37, 1
      %s39 = scalar_select %p36, %s37, %s38
      %p42 = pneg %p36
      %p43 = scmp.eq.s32.totalorder %s15, 1
      %p44 = por %p42, %p43
      %p45 = scmp.ne.s32.totalorder %s37, %s40
      %p46 = scmp.eq.s32.totalorder %s15, 0
      %p47 = por %p45, %p46
      %p48 = scmp.ne.s32.totalorder %s37, %s40
      %p49 = scmp.eq.s32.totalorder %s20, 1
      %p50 = por %p48, %p49
      %p51 = scmp.ne.s32.totalorder %s40, %s41
      %p52 = scmp.eq.s32.totalorder %s20, 0
      %p53 = por %p51, %p52
      %p54 = scmp.ne.s32.totalorder %s40, %s41
      %p55 = scmp.eq.s32.totalorder %s21, 1
      %p56 = por %p54, %p55
      %p58 = scmp.ne.s32.totalorder %s41, %s57
      %p59 = scmp.eq.s32.totalorder %s21, 0
      %p60 = por %p58, %p59
      %s61 = ssub.s32 %s22, %s34
      %p62 = scmp.eq.s32.totalorder %s61, 0
      %s64 = sadd.s32 %s63, 1
      %s65 = scalar_select %p62, %s63, %s64
      %p68 = pneg %p62
      %p69 = scmp.eq.s32.totalorder %s15, 1
      %p70 = por %p68, %p69
      %p71 = scmp.ne.s32.totalorder %s63, %s66
      %p72 = scmp.eq.s32.totalorder %s15, 0
      %p73 = por %p71, %p72
      %p74 = scmp.ne.s32.totalorder %s63, %s66
      %p75 = scmp.eq.s32.totalorder %s20, 1
      %p76 = por %p74, %p75
      %p77 = scmp.ne.s32.totalorder %s66, %s67
      %p78 = scmp.eq.s32.totalorder %s20, 0
      %p79 = por %p77, %p78
      %p80 = scmp.ne.s32.totalorder %s66, %s67
      %p81 = scmp.eq.s32.totalorder %s21, 1
      %p82 = por %p80, %p81
      %p84 = scmp.ne.s32.totalorder %s67, %s83
      %p85 = scmp.eq.s32.totalorder %s21, 0
      %p86 = por %p84, %p85
      %s87 = ssub.s32 %s23, %s30
      %s88 = ssub.s32 %s22, %s34
      %s89 = sor.u32 %s87, %s88
      %p90 = scmp.eq.s32.totalorder %s89, 0
      %s92 = sadd.s32 %s91, 1
      %s93 = scalar_select %p90, %s91, %s92
      %p96 = pneg %p90
      %p97 = scmp.eq.s32.totalorder %s15, 1
      %p98 = por %p96, %p97
      %p99 = scmp.ne.s32.totalorder %s91, %s94
      %p100 = scmp.eq.s32.totalorder %s15, 0
      %p101 = por %p99, %p100
      %p102 = scmp.ne.s32.totalorder %s91, %s94
      %p103 = scmp.eq.s32.totalorder %s20, 1
      %p104 = por %p102, %p103
      %p105 = scmp.ne.s32.totalorder %s94, %s95
      %p106 = scmp.eq.s32.totalorder %s20, 0
      %p107 = por %p105, %p106
      %p108 = scmp.ne.s32.totalorder %s94, %s95
      %p109 = scmp.eq.s32.totalorder %s21, 1
      %p110 = por %p108, %p109
      %p112 = scmp.ne.s32.totalorder %s95, %s111
      %p113 = scmp.eq.s32.totalorder %s21, 0
      %p114 = por %p112, %p113
      %p115 = scmp.le.s32.totalorder 1, %s15
      %p116 = scmp.lt.s32.totalorder %s15, 3
      %p117 = pnand %p115, %p116
      %p118 = pneg %p117
      // Predicated region
      $region9: #{tpu_custom_call.1} parent=5 // pred_check
        _
      $region10: #{tpu_custom_call.1} parent=5 // pred_check_branch
        %120 = sbr.rel (%p117) target = $region12
      $region11: #{tpu_custom_call.1} parent=5 // pred_region
        %s121 = ssub.s32 %s15, 1
        // Predicated region
        $region13: #{tpu_custom_call.1} parent=11 // pred_check
          %p122 = pneg %p53
        $region14: #{tpu_custom_call.1} parent=11 // pred_check_branch
          %124 = sbr.rel (%p122) target = $region16
        $region15: #{tpu_custom_call.1} parent=11 // pred_region
          %s125 = smul.u32 8, %s25
          %s127 = ssub.s32 512, 512
          %128 = vsyncadd [#allocation3], %s127
          %s129 = smul.addr %s125, 64
          %s130 = scalar_lea.hbm %s0, %s129
          %s131 = sshll.u32 [#allocation2], 4
          %s132 = int_to_ptr.vmem [resolvable:$true] %s131
          %137 = dma.hbm_to_vmem [thread:$0]  %s130, 512, %s132, [#allocation3], 64, 64, 4
        $region16: #{tpu_custom_call.1} parent=11 // pred_fallthru
          _
      $region12: #{tpu_custom_call.1} parent=5 // pred_fallthru
        _
      %p138 = scmp.lt.s32.totalorder %s15, 2
      // Predicated region
      $region17: #{tpu_custom_call.1} parent=5 // pred_check
        %p139 = pneg %p138
      $region18: #{tpu_custom_call.1} parent=5 // pred_check_branch
        %141 = sbr.rel (%p139) target = $region20
      $region19: #{tpu_custom_call.1} parent=5 // pred_region
        // Predicated region
        $region21: #{tpu_custom_call.1} parent=19 // pred_check
          %p142 = pneg %p73
        $region22: #{tpu_custom_call.1} parent=19 // pred_check_branch
          %144 = sbr.rel (%p142) target = $region24
        $region23: #{tpu_custom_call.1} parent=19 // pred_region
          %s145 = sand.u32 %s63, 1
          %s146 = scalar_lea.sflag [#allocation6], %s145
          %s147 = sand.u32 %s63, 1
          %s148 = smul.addr %s147, 64
          %s149 = scalar_lea.vmem [#allocation5], %s148
          %s150 = smul.u32 2, %s22
          %s151 = ssub.s32 3, %s150
          %p152 = scmp.lt.s32.totalorder %s151, 2
          %s153 = scalar_select %p152, %s151, 2
          %s154 = smul.u32 512, %s153
          %s156 = ssub.s32 1024, %s154
          %157 = vsyncadd %s146, %s156
          %p158 = scmp.ne.s32.totalorder 0, %s154
          %s159 = smul.addr %s150, 64
          %s160 = scalar_lea.hbm %s1, %s159
          %s161 = smul.u32 %s153, 4
          %s162 = smul.u32 %s161, 8
          %s163 = sshll.u32 %s149, 4
          %s164 = int_to_ptr.vmem [resolvable:$true] %s163
          %s165 = sshll.u32 %s162, 4
          %169 = dma.hbm_to_vmem [thread:$0]  (%p158), %s160, %s165, %s164, %s146, 192, 128, %s161
        $region24: #{tpu_custom_call.1} parent=19 // pred_fallthru
          _
      $region20: #{tpu_custom_call.1} parent=5 // pred_fallthru
        _
      %p170 = scmp.le.s32.totalorder 1, %s15
      %p171 = scmp.lt.s32.totalorder %s15, 3
      %p172 = pnand %p170, %p171
      %p173 = pneg %p172
      // Predicated region
      $region25: #{tpu_custom_call.1} parent=5 // pred_check
        _
      $region26: #{tpu_custom_call.1} parent=5 // pred_check_branch
        %175 = sbr.rel (%p172) target = $region28
      $region27: #{tpu_custom_call.1} parent=5 // pred_region
        %s176 = ssub.s32 %s15, 1
        // Predicated region
        $region29: #{tpu_custom_call.1} parent=27 // pred_check
          %p177 = pneg %p53
        $region30: #{tpu_custom_call.1} parent=27 // pred_check_branch
          %179 = sbr.rel (%p177) target = $region32
        $region31: #{tpu_custom_call.1} parent=27 // pred_region
          %180 = dma.done [#allocation3], 512
        $region32: #{tpu_custom_call.1} parent=27 // pred_fallthru
          _
        %s181 = sand.u32 %s66, 1
        %s182 = scalar_lea.sflag [#allocation6], %s181
        %s183 = sand.u32 %s66, 1
        %s184 = smul.addr %s183, 64
        %s185 = scalar_lea.vmem [#allocation5], %s184
        // Predicated region
        $region33: #{tpu_custom_call.1} parent=27 // pred_check
          %p186 = pneg %p79
        $region34: #{tpu_custom_call.1} parent=27 // pred_check_branch
          %188 = sbr.rel (%p186) target = $region36
        $region35: #{tpu_custom_call.1} parent=27 // pred_region
          %189 = dma.done %s182, 1024
        $region36: #{tpu_custom_call.1} parent=27 // pred_fallthru
          _
        %p190 = pneg %p53
        %p191 = pneg %p50
        %s192 = sand.u32 %s66, 1
        %s193 = scalar_lea.sflag [#allocation6], %s192
        %s194 = sand.u32 %s66, 1
        %s195 = smul.addr %s194, 64
        %s196 = scalar_lea.vmem [#allocation5], %s195
        %p197 = pneg %p79
        %p198 = pneg %p76
        %p199 = pneg %p107
        %p200 = pneg %p104
        %s201 = sand.u32 %s94, 1
        %s202 = scalar_lea.sflag [#allocation4], %s201
        %s203 = sand.u32 %s94, 1
        %s204 = smul.addr %s203, 128
        %s205 = scalar_lea.vmem [#allocation7], %s204
        %s206 = smul.u32 8, %s25
        %s207 = smul.u32 2, %s24
        %s208 = ssub.s32 3, %s207
        %p209 = scmp.lt.s32.totalorder %s208, 2
        %s210 = scalar_select %p209, %s208, 2
        %s211 = smul.u32 512, %s210
        %s212 = smul.u32 8, %s25
        %s213 = smul.u32 2, %s24
        %s214 = ssub.s32 3, %s213
        %p215 = scmp.lt.s32.totalorder %s214, 2
        %s216 = scalar_select %p215, %s214, 2
        %s217 = smul.u32 1024, %s216
        %v219 = vld [vmem:[#allocation2] sm:$0xf]
        %v220 = vld [vmem:[#allocation2 + $0x4] sm:$0xf]
        %v221 = vld [vmem:[#allocation2 + $0x8] sm:$0xf]
        %v222 = vld [vmem:[#allocation2 + $0xc] sm:$0xf]
        %v223 = vld [vmem:[#allocation2 + $0x10] sm:$0xf]
        %v224 = vld [vmem:[#allocation2 + $0x14] sm:$0xf]
        %v225 = vld [vmem:[#allocation2 + $0x18] sm:$0xf]
        %v226 = vld [vmem:[#allocation2 + $0x1c] sm:$0xf]
        %v227 = vld [vmem:[%s185] sm:$0xff]
        %v228 = vld [vmem:[%s185 + $0x8] sm:$0xff]
        %v229 = vld [vmem:[%s185 + $0x10] sm:$0xff]
        %v230 = vld [vmem:[%s185 + $0x18] sm:$0xff]
        %v231 = vld [vmem:[%s185 + $0x20] sm:$0xff]
        %v232 = vld [vmem:[%s185 + $0x28] sm:$0xff]
        %v233 = vld [vmem:[%s185 + $0x30] sm:$0xff]
        %v234 = vld [vmem:[%s185 + $0x38] sm:$0xff]
        %v243 = vunpack.c.l.b16 %v219
        %v244 = vunpack.c.l.b16 %v220
        %v245 = vunpack.c.l.b16 %v221
        %v246 = vunpack.c.l.b16 %v222
        %v247 = vunpack.c.l.b16 %v223
        %v248 = vunpack.c.l.b16 %v224
        %v249 = vunpack.c.l.b16 %v225
        %v250 = vunpack.c.l.b16 %v226
        %v251 = vpack.c.b16 %v244, %v243
        %v252 = vpack.c.b16 %v246, %v245
        %v253 = vpack.c.b16 %v248, %v247
        %v254 = vpack.c.b16 %v250, %v249
        %v263 = vunpack.c.l.b16 %v227
        %v264 = vunpack.c.h.b16 %v227
        %v265 = vunpack.c.l.b16 %v228
        %v266 = vunpack.c.h.b16 %v228
        %v267 = vunpack.c.l.b16 %v229
        %v268 = vunpack.c.h.b16 %v229
        %v269 = vunpack.c.l.b16 %v230
        %v270 = vunpack.c.h.b16 %v230
        %v271 = vunpack.c.l.b16 %v231
        %v272 = vunpack.c.h.b16 %v231
        %v273 = vunpack.c.l.b16 %v232
        %v274 = vunpack.c.h.b16 %v232
        %v275 = vunpack.c.l.b16 %v233
        %v276 = vunpack.c.h.b16 %v233
        %v277 = vunpack.c.l.b16 %v234
        %v278 = vunpack.c.h.b16 %v234
        %v279 = vpack.c.b16 %v265, %v263
        %v280 = vpack.c.b16 %v266, %v264
        %v281 = vpack.c.b16 %v269, %v267
        %v282 = vpack.c.b16 %v270, %v268
        %v283 = vpack.c.b16 %v273, %v271
        %v284 = vpack.c.b16 %v274, %v272
        %v285 = vpack.c.b16 %v277, %v275
        %v286 = vpack.c.b16 %v278, %v276
        %vm295 = vcmask 523264
        %v297 = vsel %vm295, %v251, 0
        %v300 = vsel %vm295, %v252, 0
        %v303 = vsel %vm295, %v253, 0
        %v306 = vsel %vm295, %v254, 0
        %308 = vmatprep.subr.bf16.mxu0 %v280
        %309 = vmatpush1.bf16.msra.mxu0 %v279
        %310 = vmatprep.subr.bf16.mxu0 %v282
        %311 = vmatpush1.bf16.msra.mxu0 %v281
        %312 = vmatprep.subr.bf16.mxu0 %v284
        %313 = vmatpush1.bf16.msra.mxu0 %v283
        %314 = vmatprep.subr.bf16.mxu0 %v286
        %315 = vmatpush1.bf16.msra.mxu0 %v285
        %316 = vmatprep.subr.bf16.mxu0 0
        %317 = vmatpush1.bf16.msra.mxu0 0
        %318 = vmatprep.subr.bf16.mxu0 0
        %319 = vmatpush1.bf16.msra.mxu0 0
        %320 = vmatprep.subr.bf16.mxu0 0
        %321 = vmatpush1.bf16.msra.mxu0 0
        %322 = vmatprep.subr.bf16.mxu0 0
        %323 = vmatpush1.bf16.msra.mxu0 0
        %324 = vmatprep.subr.bf16.mxu0 0
        %325 = vmatpush1.bf16.msra.mxu0 0
        %326 = vmatprep.subr.bf16.mxu0 0
        %327 = vmatpush1.bf16.msra.mxu0 0
        %328 = vmatprep.subr.bf16.mxu0 0
        %329 = vmatpush1.bf16.msra.mxu0 0
        %330 = vmatprep.subr.bf16.mxu0 0
        %331 = vmatpush1.bf16.msra.mxu0 0
        %332 = vmatprep.subr.bf16.mxu0 0
        %333 = vmatpush1.bf16.msra.mxu0 0
        %334 = vmatprep.subr.bf16.mxu0 0
        %335 = vmatpush1.bf16.msra.mxu0 0
        %336 = vmatprep.subr.bf16.mxu0 0
        %337 = vmatpush1.bf16.msra.mxu0 0
        %338 = vmatprep.subr.bf16.mxu0 0
        %339 = vmatpush1.bf16.msra.mxu0 0
        %340 = vmatprep.mubr.bf16.mxu0 0
        %341 = vmatmul.mubr.bf16.gmra.mrb[0].mxu0 %v297
        %v342 = vpop.f32.mrb[0].mxu0
        %v343 = vadd.f32 0.0, %v342
        %v344 = vpop.f32.mrb[0].mxu0
        %v345 = vadd.f32 0.0, %v344
        %v346 = vpop.f32.mrb[0].mxu0
        %v347 = vadd.f32 0.0, %v346
        %v348 = vpop.f32.mrb[0].mxu0
        %v349 = vadd.f32 0.0, %v348
        %350 = vmatprep.mubr.bf16.mxu0 0
        %351 = vmatmul.mubr.bf16.gmra.mrb[0].mxu0 %v300
        %v352 = vpop.f32.mrb[0].mxu0
        %v353 = vadd.f32 0.0, %v352
        %v354 = vpop.f32.mrb[0].mxu0
        %v355 = vadd.f32 0.0, %v354
        %v356 = vpop.f32.mrb[0].mxu0
        %v357 = vadd.f32 0.0, %v356
        %v358 = vpop.f32.mrb[0].mxu0
        %v359 = vadd.f32 0.0, %v358
        %360 = vmatprep.mubr.bf16.mxu0 0
        %361 = vmatmul.mubr.bf16.gmra.mrb[0].mxu0 %v303
        %v362 = vpop.f32.mrb[0].mxu0
        %v363 = vadd.f32 0.0, %v362
        %v364 = vpop.f32.mrb[0].mxu0
        %v365 = vadd.f32 0.0, %v364
        %v366 = vpop.f32.mrb[0].mxu0
        %v367 = vadd.f32 0.0, %v366
        %v368 = vpop.f32.mrb[0].mxu0
        %v369 = vadd.f32 0.0, %v368
        %370 = vmatprep.mubr.bf16.mxu0 0
        %371 = vmatmul.mubr.bf16.gmra.mrb[0].mxu0 %v306
        %v372 = vpop.f32.mrb[0].mxu0
        %v373 = vadd.f32 0.0, %v372
        %v374 = vpop.f32.mrb[0].mxu0
        %v375 = vadd.f32 0.0, %v374
        %v376 = vpop.f32.mrb[0].mxu0
        %v377 = vadd.f32 0.0, %v376
        %v378 = vpop.f32.mrb[0].mxu0
        %v379 = vadd.f32 0.0, %v378
        %380 = vdwg.mxu0
        %381 = vst [vmem:[%s205] sm:$0xff] %v343
        %382 = vst [vmem:[%s205 + $0x8] sm:$0xff] %v345
        %383 = vst [vmem:[%s205 + $0x10] sm:$0xff] %v347
        %384 = vst [vmem:[%s205 + $0x18] sm:$0xff] %v349
        %385 = vst [vmem:[%s205 + $0x20] sm:$0xff] %v353
        %386 = vst [vmem:[%s205 + $0x28] sm:$0xff] %v355
        %387 = vst [vmem:[%s205 + $0x30] sm:$0xff] %v357
        %388 = vst [vmem:[%s205 + $0x38] sm:$0xff] %v359
        %389 = vst [vmem:[%s205 + $0x40] sm:$0xff] %v363
        %390 = vst [vmem:[%s205 + $0x48] sm:$0xff] %v365
        %391 = vst [vmem:[%s205 + $0x50] sm:$0xff] %v367
        %392 = vst [vmem:[%s205 + $0x58] sm:$0xff] %v369
        %393 = vst [vmem:[%s205 + $0x60] sm:$0xff] %v373
        %394 = vst [vmem:[%s205 + $0x68] sm:$0xff] %v375
        %395 = vst [vmem:[%s205 + $0x70] sm:$0xff] %v377
        %396 = vst [vmem:[%s205 + $0x78] sm:$0xff] %v379
        %s397 = sand.u32 %s94, 1
        %s398 = scalar_lea.sflag [#allocation4], %s397
        %s399 = sand.u32 %s94, 1
        %s400 = smul.addr %s399, 128
        %s401 = scalar_lea.vmem [#allocation7], %s400
        // Predicated region
        $region37: #{tpu_custom_call.1} parent=27 // pred_check
          %p402 = pneg %p104
        $region38: #{tpu_custom_call.1} parent=27 // pred_check_branch
          %404 = sbr.rel (%p402) target = $region40
        $region39: #{tpu_custom_call.1} parent=27 // pred_region
          %s405 = smul.u32 8, %s25
          %s406 = smul.u32 2, %s24
          %s407 = ssub.s32 3, %s406
          %p408 = scmp.lt.s32.totalorder %s407, 2
          %s409 = scalar_select %p408, %s407, 2
          %s410 = smul.u32 1024, %s409
          %s412 = ssub.s32 2048, %s410
          %413 = vsyncadd %s398, %s412
          %p414 = scmp.ne.s32.totalorder 0, %s410
          %s415 = smul.addr %s405, 3
          %s416 = sadd.s32 %s406, %s415
          %s417 = smul.addr %s416, 128
          %s418 = scalar_lea.hbm %s2, %s417
          %s419 = smul.u32 %s409, 8
          %s420 = smul.u32 %s419, 8
          %s421 = sshll.u32 %s401, 4
          %s422 = int_to_ptr.vmem [resolvable:$true] %s421
          %s423 = sshll.u32 %s420, 4
          %427 = dma.vmem_to_hbm [thread:$0]  (%p414), %s422, %s423, %s418, %s398, 256, 384, %s419
        $region40: #{tpu_custom_call.1} parent=27 // pred_fallthru
          _
      $region28: #{tpu_custom_call.1} parent=5 // pred_fallthru
        _
      %p428 = scmp.le.s32.totalorder 2, %s15
      // Predicated region
      $region41: #{tpu_custom_call.1} parent=5 // pred_check
        %p429 = pneg %p428
      $region42: #{tpu_custom_call.1} parent=5 // pred_check_branch
        %431 = sbr.rel (%p429) target = $region44
      $region43: #{tpu_custom_call.1} parent=5 // pred_region
        %s432 = ssub.s32 %s15, 2
        // Predicated region
        $region45: #{tpu_custom_call.1} parent=43 // pred_check
          %p433 = pneg %p110
        $region46: #{tpu_custom_call.1} parent=43 // pred_check_branch
          %435 = sbr.rel (%p433) target = $region48
        $region47: #{tpu_custom_call.1} parent=43 // pred_region
          %s436 = sand.u32 %s95, 1
          %s437 = scalar_lea.sflag [#allocation4], %s436
          %s438 = sand.u32 %s95, 1
          %s439 = smul.addr %s438, 128
          %s440 = scalar_lea.vmem [#allocation7], %s439
          %441 = dma.done %s437, 2048
        $region48: #{tpu_custom_call.1} parent=43 // pred_fallthru
          _
      $region44: #{tpu_custom_call.1} parent=5 // pred_fallthru
        _
    $region6: #{tpu_custom_call.1} parent=1 // loop_footer
      %s19 = sadd.s32 1, %s15
    $region7: #{tpu_custom_call.1} parent=1 // loop_footer_branch
      %14 = sbr.rel target = $region3
    $region8: #{tpu_custom_call.1} parent=1 // loop_exit
      _
    %442 = vsyncpa [#allocation3], 1
    %s443 = scalar_lea.sflag [#allocation3], 1
    %444 = vsyncpa %s443, 1
    %445 = vsyncpa [#allocation6], 1
    %s446 = scalar_lea.sflag [#allocation6], 1
    %447 = vsyncpa %s446, 1
    %448 = vsyncpa [#allocation4], 1
    %s449 = scalar_lea.sflag [#allocation4], 1
    %450 = vsyncpa %s449, 1

</llo_original>
